<compile_context>
chip_gen: v5e
topology: v5e:2x2
jax: 0.10.0
libtpu: 0.0.40
codegen_flags: <defaults>
</compile_context>

<pallas_src>
import functools
import math

import jax
import jax.numpy as jnp
from jax import lax
from jax.experimental import pallas as pl
from jax.experimental.pallas import tpu as pltpu

_LOG_EPS = math.log(1e-10)   # ln of the PyTorch clamp minimum
_NEG_BIG = -1e30             # "minus infinity" for masked logits (no inf arithmetic)


def _round_up(x, m):
    return ((x + m - 1) // m) * m


def _vmem_capacity_bytes():
    """Physical per-core VMEM; conservative (v7x) fallback if the query fails."""
    try:
        info = pltpu.get_tpu_info()
        cap = getattr(info, "vmem_capacity_bytes", None)
        if cap:
            return int(cap)
    except Exception:
        pass
    return 64 * 1024 * 1024


def _contrastive_kernel(*refs, tq, tk, n_valid, n_pad, inv_tau, sim,
                        single_view, two_pass):
    if sim == 'l2':
        (xq_ref, xk_ref, labq_ref, labk_ref, sqq_ref, sqk_ref,
         out_ref, m_run, s_run, ps_run, pn_run) = refs
    else:
        (xq_ref, xk_ref, labq_ref, labk_ref,
         out_ref, m_run, s_run, ps_run, pn_run) = refs

    i = pl.program_id(0)          # query-row tile
    p = pl.program_id(1)          # phase (only used by the two-pass dot path)
    k = pl.program_id(2)          # key tile
    nk = pl.num_programs(2)
    row0 = i * tq
    col0 = k * tk
    padded = (n_pad != n_valid)   # static

    # Gram tile on the MXU in the operand dtype (bf16 passes straight through),
    # accumulated in f32.  Both operands contract their feature axis, so no
    # transpose of X is ever materialised.
    g = lax.dot_general(xq_ref[...], xk_ref[...], (((1,), (1,)), ((), ())),
                        preferred_element_type=jnp.float32)           # (tq, tk)

    need_jj = padded or (not single_view)
    jj = (lax.broadcasted_iota(jnp.int32, (tq, tk), 1) + col0) if need_jj else None

    def offdiag_mask():
        ii = lax.broadcasted_iota(jnp.int32, (tq, tk), 0) + row0
        return ii != jj

    def positive_mask():
        # Padded key columns carry a sentinel label, so no extra validity plane
        # is needed here.
        eq = labq_ref[...] == labk_ref[...]           # (tq,1)==(1,tk) -> (tq,tk)
        if not single_view:
            eq = jnp.logical_and(eq, offdiag_mask())
        return eq

    # ------------------------------------------------------------------ l2 --
    if sim == 'l2':
        # logit = -||xi - xj||^2 / tau via the Gram expansion; squared norms are
        # precomputed once in the wrapper (hoisted out of the key loop).
        logit = (2.0 * g - sqq_ref[...] - sqk_ref[...]) * inv_tau
        if padded:
            logit = jnp.where(jj < n_valid, logit, _NEG_BIG)

        @pl.when(k == 0)
        def _():
            s_run[...] = jnp.zeros_like(s_run)
            ps_run[...] = jnp.zeros_like(ps_run)
            pn_run[...] = jnp.zeros_like(pn_run)

        s = jnp.exp(logit)
        if not single_view:
            s = jnp.where(offdiag_mask(), s, 0.0)
        s_run[...] += jnp.sum(s, axis=1, keepdims=True)

        pos = jnp.where(positive_mask(), 1.0, 0.0)
        pn_run[...] += jnp.sum(pos, axis=1, keepdims=True)
        ps_run[...] += jnp.sum(pos * jnp.maximum(logit, _LOG_EPS),
                               axis=1, keepdims=True)

        @pl.when(k == nk - 1)
        def _():
            log_s_i = jnp.log(jnp.maximum(s_run[...], 1e-10))
            # Rows with no positives divide by zero -> NaN, exactly like the
            # PyTorch reference; padded rows are sliced off in the wrapper.
            out_ref[...] = log_s_i - ps_run[...] / pn_run[...]
        return

    # ----------------------------------------------------------------- dot --
    m = g * inv_tau
    if padded:
        m = jnp.where(jj < n_valid, m, _NEG_BIG)

    if not two_pass:
        # Single full-width key tile: the exact row max is available in-tile.
        logit = m - jnp.max(m, axis=1, keepdims=True)
        s = jnp.exp(logit)
        if not single_view:
            s = jnp.where(offdiag_mask(), s, 0.0)
        s_i = jnp.sum(s, axis=1, keepdims=True)
        pos = jnp.where(positive_mask(), 1.0, 0.0)
        pos_num = jnp.sum(pos, axis=1, keepdims=True)
        pos_sum = jnp.sum(pos * jnp.maximum(logit, _LOG_EPS),
                          axis=1, keepdims=True)
        out_ref[...] = jnp.log(jnp.maximum(s_i, 1e-10)) - pos_sum / pos_num
        return

    # Two key passes (phase axis p): pass 0 builds the exact per-row max and the
    # online-rescaled exp-sum s_i; pass 1 re-forms each Gram tile and accumulates
    # the clamped positive-pair logits against the now-final row max (the clamp
    # max(logit, ln 1e-10) depends on the global row max, so it cannot be folded
    # into a single online pass without changing the reference semantics).
    @pl.when(jnp.logical_and(p == 0, k == 0))
    def _():
        m_run[...] = jnp.full(m_run.shape, _NEG_BIG, dtype=jnp.float32)
        s_run[...] = jnp.zeros_like(s_run)
        ps_run[...] = jnp.zeros_like(ps_run)
        pn_run[...] = jnp.zeros_like(pn_run)

    @pl.when(p == 0)
    def _():
        m_new = jnp.maximum(m_run[...], jnp.max(m, axis=1, keepdims=True))
        s = jnp.exp(m - m_new)
        if not single_view:
            s = jnp.where(offdiag_mask(), s, 0.0)
        s_run[...] = (jnp.exp(m_run[...] - m_new) * s_run[...]
                      + jnp.sum(s, axis=1, keepdims=True))
        m_run[...] = m_new

    @pl.when(p == 1)
    def _():
        clamped = jnp.maximum(m - m_run[...], _LOG_EPS)
        pos = jnp.where(positive_mask(), 1.0, 0.0)
        pn_run[...] += jnp.sum(pos, axis=1, keepdims=True)
        ps_run[...] += jnp.sum(pos * clamped, axis=1, keepdims=True)

    @pl.when(jnp.logical_and(p == 1, k == nk - 1))
    def _():
        log_s_i = jnp.log(jnp.maximum(s_run[...], 1e-10))
        out_ref[...] = log_s_i - ps_run[...] / pn_run[...]


def contrastive_loss(batch_labels, *x, tau=1.0, sim='dot', tq=None, tk=None):
    """Pallas TPU implementation of Contrastive_Loss.forward(batch_labels, *x)."""
    X = jnp.concatenate(x, axis=0)
    single_view = (len(x) == 1)

    if sim == 'l2':
        # Gram expansion of ||xi-xj||^2 on bf16 operands loses too much to
        # cancellation -> always f32 for the l2 similarity.
        X = X.astype(jnp.float32)
    elif jnp.dtype(X.dtype) not in (jnp.dtype(jnp.bfloat16), jnp.dtype(jnp.float32)):
        X = X.astype(jnp.float32)

    N, D = X.shape
    assert batch_labels.shape[0] == N, "labels must cover the concatenated batch"
    labels = batch_labels.astype(jnp.int32).reshape(N)

    itemsize = jnp.dtype(X.dtype).itemsize
    vmem_cap = _vmem_capacity_bytes()
    big_vmem = vmem_cap >= (100 << 20)        # v5e/v6e (128 MiB) vs v7x (64 MiB)

    # ---- tile selection ----------------------------------------------------
    row_mult = 16 if X.dtype == jnp.dtype(jnp.bfloat16) else 8
    if tq is None:
        if N <= 256:
            # Split even small batches into (at least) two row tiles so both
            # v7x TensorCores get work; harmless on single-core chips.
            tq = _round_up(max((_round_up(N, row_mult) + 1) // 2, row_mult), row_mult)
        else:
            tq = 512 if big_vmem else 256
    tq = _round_up(int(tq), 8)
    if tk is None:
        # One key tile while the whole batch is cheap per step; beyond that,
        # tile the key axis so only (tq, tk) temporaries and a (tk, D) slab of
        # X are live at once.
        tk = _round_up(N, tq) if N <= 1024 else 1024
    tk = int(tk)

    n_pad = _round_up(N, math.lcm(tq, tk))
    grid_rows = n_pad // tq
    grid_keys = n_pad // tk
    if grid_keys > 1:
        assert tk % 128 == 0, "key tile must be lane-aligned when the key axis is tiled"
    two_pass = (sim != 'l2') and (grid_keys > 1)
    n_phase = 2 if two_pass else 1

    # ---- padding (sentinel labels so the positive mask needs no extra plane) --
    pad = n_pad - N
    if pad:
        X = jnp.pad(X, ((0, pad), (0, 0)))
        sentinel = jnp.min(labels) - jnp.int32(1)
        labels = jnp.concatenate([labels, jnp.full((pad,), sentinel, jnp.int32)])

    lab_col = labels.reshape(n_pad, 1)       # query-side labels -> (tq,1) blocks
    lab_row = labels.reshape(1, n_pad)       # key-side labels   -> (1,tk) blocks

    idx_q = lambda i, p, k: (i, 0)
    idx_k = lambda i, p, k: (k, 0)
    idx_kr = lambda i, p, k: (0, k)

    operands = [X, X, lab_col, lab_row]
    in_specs = [
        pl.BlockSpec((tq, D), idx_q),        # X as queries (row tile, via BlockSpec)
        pl.BlockSpec((tk, D), idx_k),        # X as keys (key tile, double-buffered)
        pl.BlockSpec((tq, 1), idx_q),        # query labels
        pl.BlockSpec((1, tk), idx_kr),       # key labels
    ]
    if sim == 'l2':
        sq = jnp.sum(jnp.square(X), axis=1)  # hoisted ||x||^2 (f32, computed once)
        operands += [sq.reshape(n_pad, 1), sq.reshape(1, n_pad)]
        in_specs += [pl.BlockSpec((tq, 1), idx_q),
                     pl.BlockSpec((1, tk), idx_kr)]

    # ---- VMEM budget (double-buffered blocks + lane padding + live temporaries) --
    n_small = 2 if sim == 'l2' else 1
    est_vmem = (
        2 * (tq + tk) * D * itemsize                # X blocks, x2 buffers
        + 2 * n_small * (tq * 128 + 8 * tk) * 4     # labels (+ norms), padded, x2
        + 2 * tq * 128 * 4                          # output block
        + 4 * tq * 128 * 4                          # scratch accumulators
        + 10 * tq * tk * 4                          # live (tq, tk) f32 temporaries
        + (4 << 20)                                 # compiler slack
    )
    vmem_limit = int(min(0.9 * vmem_cap, max(2 * est_vmem, 32 << 20)))

    kernel = functools.partial(
        _contrastive_kernel, tq=tq, tk=tk, n_valid=N, n_pad=n_pad,
        inv_tau=1.0 / float(tau), sim=sim, single_view=single_view,
        two_pass=two_pass)

    log_p = pl.pallas_call(
        kernel,
        grid=(grid_rows, n_phase, grid_keys),
        in_specs=in_specs,
        out_specs=pl.BlockSpec((tq, 1), idx_q),
        out_shape=jax.ShapeDtypeStruct((n_pad, 1), jnp.float32),
        scratch_shapes=[pltpu.VMEM((tq, 1), jnp.float32)] * 4,  # m, s, pos_logit, pos_num
        compiler_params=pltpu.CompilerParams(
            dimension_semantics=("parallel", "arbitrary", "arbitrary"),
            vmem_limit_bytes=vmem_limit),
    )(*operands)

    # Final mean over the (unpadded) rows is a trivial N-element reduce.
    return jnp.mean(log_p[:N, 0])


def reference_loss(batch_labels, xs, tau, sim, matmul_dtype=None):
    """Pure-JAX reference mirroring the PyTorch module exactly."""
    X = jnp.concatenate(xs, axis=0).astype(jnp.float32)
    N = X.shape[0]
    if sim == 'l2':
        diff = X[:, None, :] - X[None, :, :]
        M = jnp.sum(diff ** 2, axis=-1)
        s = jnp.exp(-M / tau)
    else:
        if matmul_dtype is not None:
            Xm = X.astype(matmul_dtype)
            M = jnp.matmul(Xm, Xm.T, preferred_element_type=jnp.float32) / tau
        else:
            M = jnp.matmul(X, X.T, precision=jax.lax.Precision.HIGHEST) / tau
        s = jnp.exp(M - jnp.max(M, axis=1, keepdims=True))
    if len(xs) == 1:
        mask_i = jnp.ones((N, N), jnp.float32)
    else:
        mask_i = 1.0 - jnp.eye(N, dtype=jnp.float32)
    lab = batch_labels.astype(jnp.float32)
    mask_j = (lab[:, None] - lab[None, :] == 0).astype(jnp.float32) * mask_i
    pos_num = jnp.sum(mask_j, axis=1)
    s_i = jnp.maximum(jnp.sum(s * mask_i, axis=1), 1e-10)
    s_j = jnp.maximum(s * mask_j, 1e-10)
    log_p = jnp.sum(-jnp.log(s_j / s_i[:, None]) * mask_j, axis=1) / pos_num
    return jnp.mean(log_p)


if __name__ == "__main__":
    key = jax.random.PRNGKey(0)
    k1, k2, k3, k4 = jax.random.split(key, 4)

    B, D = 8, 32
    x1 = jax.random.normal(k1, (B, D), jnp.float32)
    x2 = jax.random.normal(k2, (B, D), jnp.float32)
    labels16 = jnp.tile(jnp.arange(4, dtype=jnp.int32), 4)   # each class x4
    tau = 4.0

    # 1) dot similarity, two views, f32 (single key tile, two row tiles).
    out1 = contrastive_loss(labels16, x1, x2, tau=tau, sim='dot')
    ref1 = reference_loss(labels16, [x1, x2], tau=tau, sim='dot')

    # 2) l2 similarity, single view, N=12 (exercises padding + sentinel labels).
    X12 = jnp.concatenate([x1, x2], axis=0)[:12]
    out2 = contrastive_loss(labels16[:12], X12, tau=tau, sim='l2')
    ref2 = reference_loss(labels16[:12], [X12], tau=tau, sim='l2')

    # 3) bf16 operands feed the MXU directly (half the HBM bytes).
    out3 = contrastive_loss(labels16, x1.astype(jnp.bfloat16),
                            x2.astype(jnp.bfloat16), tau=tau, sim='dot')
    ref3 = reference_loss(labels16, [x1, x2], tau=tau, sim='dot',
                          matmul_dtype=jnp.bfloat16)

    # 4/5) forced key tiling (tq=tk=128, N=300 -> 3x3 tiles + padding) so the
    # two-pass online-max dot path and the key-accumulating l2 path are
    # exercised and verified even at this small scale.
    y1 = jax.random.normal(k3, (150, D), jnp.float32)
    y2 = jax.random.normal(k4, (150, D), jnp.float32)
    lab150 = jax.random.randint(jax.random.PRNGKey(7), (150,), 0, 10, jnp.int32)
    lab300 = jnp.concatenate([lab150, lab150])
    out4 = contrastive_loss(lab300, y1, y2, tau=tau, sim='dot', tq=128, tk=128)
    ref4 = reference_loss(lab300, [y1, y2], tau=tau, sim='dot')
    Y300 = jnp.concatenate([y1, y2], axis=0)
    out5 = contrastive_loss(lab300, Y300, tau=tau, sim='l2', tq=128, tk=128)
    ref5 = reference_loss(lab300, [Y300], tau=tau, sim='l2')

    jax.block_until_ready((out1, out2, out3, out4, out5))

    assert jnp.allclose(out1, ref1, atol=2e-3, rtol=2e-3), (out1, ref1)
    assert jnp.allclose(out2, ref2, atol=2e-3, rtol=2e-3), (out2, ref2)
    assert jnp.allclose(out3, ref3, atol=5e-3, rtol=5e-3), (out3, ref3)
    assert jnp.allclose(out4, ref4, atol=2e-3, rtol=2e-3), (out4, ref4)
    assert jnp.allclose(out5, ref5, atol=2e-3, rtol=2e-3), (out5, ref5)
    print("KERNEL_OK")
</pallas_src>

<mosaic_0001>
module attributes {stable_mosaic.version = 11 : i64} {
  func.func @_contrastive_kernel(%arg0: i32, %arg1: i32, %arg2: i32, %arg3: memref<8x32xf32, #tpu.memory_space<vmem>>, %arg4: memref<16x32xf32, #tpu.memory_space<vmem>>, %arg5: memref<8x1xi32, #tpu.memory_space<vmem>>, %arg6: memref<1x16xi32, #tpu.memory_space<vmem>>, %arg7: memref<8x1xf32, #tpu.memory_space<vmem>>, %arg8: memref<8x1xf32, #tpu.memory_space<vmem>>, %arg9: memref<8x1xf32, #tpu.memory_space<vmem>>, %arg10: memref<8x1xf32, #tpu.memory_space<vmem>>, %arg11: memref<8x1xf32, #tpu.memory_space<vmem>>) attributes {dimension_semantics = [#tpu.dimension_semantics<parallel>, #tpu.dimension_semantics<arbitrary>, #tpu.dimension_semantics<arbitrary>], iteration_bounds = array<i64: 2, 1, 1>, scalar_prefetch = 0 : i64, scratch_operands = 4 : i64, tpu.core_type = #tpu.core_type<tc>, window_params = [{transform_indices = @transform_0, window_bounds = array<i64: 8, 32>}, {transform_indices = @transform_1, window_bounds = array<i64: 16, 32>}, {transform_indices = @transform_2, window_bounds = array<i64: 8, 1>}, {transform_indices = @transform_3, window_bounds = array<i64: 1, 16>}, {transform_indices = @transform_4, window_bounds = array<i64: 8, 1>}]} {
    %c8_i32 = arith.constant 8 : i32
    %0 = arith.muli %arg0, %c8_i32 : i32
    %c16_i32 = arith.constant 16 : i32
    %1 = arith.muli %arg2, %c16_i32 : i32
    %c0 = arith.constant 0 : index
    %c0_0 = arith.constant 0 : index
    %2 = vector.load %arg3[%c0, %c0_0] : memref<8x32xf32, #tpu.memory_space<vmem>>, vector<8x32xf32>
    %c0_1 = arith.constant 0 : index
    %c0_2 = arith.constant 0 : index
    %3 = vector.load %arg4[%c0_1, %c0_2] : memref<16x32xf32, #tpu.memory_space<vmem>>, vector<16x32xf32>
    %cst = arith.constant dense<0.000000e+00> : vector<8x16xf32>
    %4 = tpu.matmul %2, %3, %cst {dimension_numbers = #tpu.dot_dimension_numbers<[1], [1], [0], [0], [0, 0, 1, 0], [], []>} : vector<8x32xf32>, vector<16x32xf32>, vector<8x16xf32> -> vector<8x16xf32>
    %5 = tpu.iota {dimensions = array<i32: 1>} : vector<8x16xi32>
    %6 = vector.broadcast %1 : i32 to vector<8x16xi32>
    %7 = arith.addi %5, %6 : vector<8x16xi32>
    %cst_3 = arith.constant 2.500000e-01 : f32
    %8 = vector.broadcast %cst_3 : f32 to vector<8x16xf32>
    %9 = arith.mulf %4, %8 : vector<8x16xf32>
    %cst_4 = arith.constant dense<0xFF800000> : vector<8xf32>
    %10 = vector.multi_reduction <maximumf>, %9, %cst_4 [1] : vector<8x16xf32> to vector<8xf32>
    %11 = vector.shape_cast %10 : vector<8xf32> to vector<8x1xf32>
    %12 = vector.broadcast %11 : vector<8x1xf32> to vector<8x16xf32>
    %13 = arith.subf %9, %12 : vector<8x16xf32>
    %14 = math.exp %13 : vector<8x16xf32>
    %15 = tpu.iota {dimensions = array<i32: 0>} : vector<8x16xi32>
    %16 = vector.broadcast %0 : i32 to vector<8x16xi32>
    %17 = arith.addi %15, %16 : vector<8x16xi32>
    %18 = arith.cmpi ne, %17, %7 : vector<8x16xi32>
    %cst_5 = arith.constant 0.000000e+00 : f32
    %19 = vector.broadcast %cst_5 : f32 to vector<8x16xf32>
    %20 = arith.select %18, %14, %19 : vector<8x16xi1>, vector<8x16xf32>
    %cst_6 = arith.constant dense<0.000000e+00> : vector<8xf32>
    %21 = vector.multi_reduction <add>, %20, %cst_6 [1] : vector<8x16xf32> to vector<8xf32>
    %22 = vector.shape_cast %21 : vector<8xf32> to vector<8x1xf32>
    %c0_7 = arith.constant 0 : index
    %c0_8 = arith.constant 0 : index
    %23 = vector.load %arg5[%c0_7, %c0_8] : memref<8x1xi32, #tpu.memory_space<vmem>>, vector<8x1xi32>
    %c0_9 = arith.constant 0 : index
    %c0_10 = arith.constant 0 : index
    %24 = vector.load %arg6[%c0_9, %c0_10] : memref<1x16xi32, #tpu.memory_space<vmem>>, vector<1x16xi32>
    %25 = vector.broadcast %23 : vector<8x1xi32> to vector<8x16xi32>
    %26 = vector.broadcast %24 : vector<1x16xi32> to vector<8x16xi32>
    %27 = arith.cmpi eq, %25, %26 : vector<8x16xi32>
    %28 = tpu.iota {dimensions = array<i32: 0>} : vector<8x16xi32>
    %29 = vector.broadcast %0 : i32 to vector<8x16xi32>
    %30 = arith.addi %28, %29 : vector<8x16xi32>
    %31 = arith.cmpi ne, %30, %7 : vector<8x16xi32>
    %32 = arith.andi %27, %31 : vector<8x16xi1>
    %cst_11 = arith.constant 1.000000e+00 : f32
    %cst_12 = arith.constant 0.000000e+00 : f32
    %33 = vector.broadcast %cst_11 : f32 to vector<8x16xf32>
    %34 = vector.broadcast %cst_12 : f32 to vector<8x16xf32>
    %35 = arith.select %32, %33, %34 : vector<8x16xi1>, vector<8x16xf32>
    %cst_13 = arith.constant dense<0.000000e+00> : vector<8xf32>
    %36 = vector.multi_reduction <add>, %35, %cst_13 [1] : vector<8x16xf32> to vector<8xf32>
    %37 = vector.shape_cast %36 : vector<8xf32> to vector<8x1xf32>
    %cst_14 = arith.constant -23.0258503 : f32
    %38 = vector.broadcast %cst_14 : f32 to vector<8x16xf32>
    %39 = arith.maximumf %13, %38 : vector<8x16xf32>
    %40 = arith.mulf %35, %39 : vector<8x16xf32>
    %cst_15 = arith.constant dense<0.000000e+00> : vector<8xf32>
    %41 = vector.multi_reduction <add>, %40, %cst_15 [1] : vector<8x16xf32> to vector<8xf32>
    %42 = vector.shape_cast %41 : vector<8xf32> to vector<8x1xf32>
    %cst_16 = arith.constant 1.000000e-10 : f32
    %43 = vector.broadcast %cst_16 : f32 to vector<8x1xf32>
    %44 = arith.maximumf %22, %43 : vector<8x1xf32>
    %45 = math.log %44 : vector<8x1xf32>
    %46 = arith.divf %42, %37 : vector<8x1xf32>
    %47 = arith.subf %45, %46 : vector<8x1xf32>
    %c0_17 = arith.constant 0 : index
    %c0_18 = arith.constant 0 : index
    %48 = vector.load %arg7[%c0_17, %c0_18] : memref<8x1xf32, #tpu.memory_space<vmem>>, vector<8x1xf32>
    tpu.vector_store %arg7[%c0_17, %c0_18], %47 {strides = array<i32>} : memref<8x1xf32, #tpu.memory_space<vmem>>, vector<8x1xf32>,
    return
  }
  func.func @transform_0(%arg0: i32, %arg1: i32, %arg2: i32) -> (i32, i32) {
    %c0_i32 = arith.constant 0 : i32
    %c0_i32_0 = arith.constant 0 : i32
    return %arg0, %c0_i32 : i32, i32
  }
  func.func @transform_1(%arg0: i32, %arg1: i32, %arg2: i32) -> (i32, i32) {
    %c0_i32 = arith.constant 0 : i32
    %c0_i32_0 = arith.constant 0 : i32
    return %arg2, %c0_i32 : i32, i32
  }
  func.func @transform_2(%arg0: i32, %arg1: i32, %arg2: i32) -> (i32, i32) {
    %c0_i32 = arith.constant 0 : i32
    %c0_i32_0 = arith.constant 0 : i32
    return %arg0, %c0_i32 : i32, i32
  }
  func.func @transform_3(%arg0: i32, %arg1: i32, %arg2: i32) -> (i32, i32) {
    %c0_i32 = arith.constant 0 : i32
    %c0_i32_0 = arith.constant 0 : i32
    return %c0_i32, %arg2 : i32, i32
  }
  func.func @transform_4(%arg0: i32, %arg1: i32, %arg2: i32) -> (i32, i32) {
    %c0_i32 = arith.constant 0 : i32
    %c0_i32_0 = arith.constant 0 : i32
    return %arg0, %c0_i32 : i32, i32
  }
}

</mosaic_0001>

<llo_original>
// kernel: tpu_custom_call.1
$region0: #{tpu_custom_call.1}
  #allocation0 [shape = 'u32[]', space=smem, size = 0x4, offset = 0x4, fixed_abs, tag = 'smem constant byte address 0x4 - core index']
  #allocation1 [shape = 'u32[72,128]{1,0:T(1,128)}', space=vmem, size = 0x9000, scoped, tag = 'internal scratch']
  #allocation2 [shape = 'f32[8,1]{1,0:T(8,128)}', space=vmem, size = 0x1000, scoped, tag = 'scratch operand']
  #allocation3 [shape = 'f32[8,1]{1,0:T(8,128)}', space=vmem, size = 0x1000, scoped, tag = 'scratch operand']
  #allocation4 [shape = 'f32[8,1]{1,0:T(8,128)}', space=vmem, size = 0x1000, scoped, tag = 'scratch operand']
  #allocation5 [shape = 'f32[8,1]{1,0:T(8,128)}', space=vmem, size = 0x1000, scoped, tag = 'scratch operand']
  %s0 = inlined_call_operand.vmem [shape: f32[16,32], index: 0, kind: input, shape index: {}]
  %s1 = inlined_call_operand.hbm [shape: f32[16,32], index: 1, kind: input, shape index: {}]
  %s2 = inlined_call_operand.vmem [shape: s32[16,1], index: 2, kind: input, shape index: {}]
  %s3 = inlined_call_operand.vmem [shape: s32[1,16], index: 3, kind: input, shape index: {}]
  %s4 = inlined_call_operand.vmem [shape: f32[16,1], index: 4, kind: output, shape index: {}]
  %s5 = sld [smem:[#allocation0]]
  $region53: #{tpu_custom_call.1} parent=0
    _
  %s7 = ssub.s32 1, %s5
  %s8 = scalar_select 0, %s7, %s5
  $region1: #{tpu_custom_call.1} parent=0
    #allocation6 [shape = 'u8[8192]{0}', space=vmem, size = 0x2000, scoped, tag = 'input window, operand 1, single buffered']
    #allocation7 [shape = 's32[2]{0}', space=sflag, size = 0x8, scoped, tag = 'scoped memory for tpu_custom_call.1']
    %9 = vsyncpa [#allocation7], 0
    loop: start=0, step=1, limit=4
    $region2: #{tpu_custom_call.1} parent=1 // loop_pre_header
      _
    $region3: #{tpu_custom_call.1} parent=1 // loop_header
      %s11 = sphi 0, %s15
      %p12 = scmp.ge.s32.totalorder %s11, 4
      %s18 = sphi 0, %s37
      %s19 = sphi 0, %s33
      %s20 = sphi 0, %s29
      %s21 = sphi 0, %s18
      %s22 = sphi 0, %s19
      %s23 = sphi 0, %s20
      %s24 = sphi 0, %s21
      %s25 = sphi 0, %s22
      %s26 = sphi 0, %s23
      %s40 = sphi 0, %s42
      %s43 = sphi 0, %s40
      %s44 = sphi 0, %s43
      %s60 = sphi 0, %s44
      %s66 = sphi 0, %s68
      %s69 = sphi 0, %s66
      %s70 = sphi 0, %s69
      %s86 = sphi 0, %s70
      %s92 = sphi 0, %s94
      %s95 = sphi 0, %s92
      %s96 = sphi 0, %s95
      %s112 = sphi 0, %s96
      %s118 = sphi 0, %s120
      %s121 = sphi 0, %s118
      %s122 = sphi 0, %s121
      %s138 = sphi 0, %s122
      %s144 = sphi 0, %s146
      %s147 = sphi 0, %s144
      %s148 = sphi 0, %s147
      %s164 = sphi 0, %s148
    $region4: #{tpu_custom_call.1} parent=1 // loop_header_branch
      %14 = sbr.rel (%p12) target = $region8
    $region5: #{tpu_custom_call.1} parent=1 // loop_body
      %s16 = ssub.s32 %s11, 1
      %s17 = ssub.s32 %s11, 2
      %s27 = sadd.s32 1, %s20
      %p28 = scmp.ge.s32.totalorder %s27, 1
      %s29 = scalar_select %p28, 0, %s27
      %s30 = sadd.s32 1, %s19
      %s31 = scalar_select %p28, %s30, %s19
      %p32 = scmp.ge.s32.totalorder %s31, 1
      %s33 = scalar_select %p32, 0, %s31
      %s34 = sadd.s32 1, %s18
      %s35 = scalar_select %p32, %s34, %s18
      %p36 = scmp.ge.s32.totalorder %s35, 2
      %s37 = scalar_select %p36, 0, %s35
      %s38 = ssub.s32 %s18, %s37
      %p39 = scmp.eq.s32.totalorder %s38, 0
      %s41 = sadd.s32 %s40, 1
      %s42 = scalar_select %p39, %s40, %s41
      %p45 = pneg %p39
      %p46 = scmp.eq.s32.totalorder %s11, 1
      %p47 = por %p45, %p46
      %p48 = scmp.ne.s32.totalorder %s40, %s43
      %p49 = scmp.eq.s32.totalorder %s11, 0
      %p50 = por %p48, %p49
      %p51 = scmp.ne.s32.totalorder %s40, %s43
      %p52 = scmp.eq.s32.totalorder %s16, 1
      %p53 = por %p51, %p52
      %p54 = scmp.ne.s32.totalorder %s43, %s44
      %p55 = scmp.eq.s32.totalorder %s16, 0
      %p56 = por %p54, %p55
      %p57 = scmp.ne.s32.totalorder %s43, %s44
      %p58 = scmp.eq.s32.totalorder %s17, 1
      %p59 = por %p57, %p58
      %p61 = scmp.ne.s32.totalorder %s44, %s60
      %p62 = scmp.eq.s32.totalorder %s17, 0
      %p63 = por %p61, %p62
      %s64 = ssub.s32 %s20, %s29
      %p65 = scmp.eq.s32.totalorder %s64, 0
      %s67 = sadd.s32 %s66, 1
      %s68 = scalar_select %p65, %s66, %s67
      %p71 = pneg %p65
      %p72 = scmp.eq.s32.totalorder %s11, 1
      %p73 = por %p71, %p72
      %p74 = scmp.ne.s32.totalorder %s66, %s69
      %p75 = scmp.eq.s32.totalorder %s11, 0
      %p76 = por %p74, %p75
      %p77 = scmp.ne.s32.totalorder %s66, %s69
      %p78 = scmp.eq.s32.totalorder %s16, 1
      %p79 = por %p77, %p78
      %p80 = scmp.ne.s32.totalorder %s69, %s70
      %p81 = scmp.eq.s32.totalorder %s16, 0
      %p82 = por %p80, %p81
      %p83 = scmp.ne.s32.totalorder %s69, %s70
      %p84 = scmp.eq.s32.totalorder %s17, 1
      %p85 = por %p83, %p84
      %p87 = scmp.ne.s32.totalorder %s70, %s86
      %p88 = scmp.eq.s32.totalorder %s17, 0
      %p89 = por %p87, %p88
      %s90 = ssub.s32 %s18, %s37
      %p91 = scmp.eq.s32.totalorder %s90, 0
      %s93 = sadd.s32 %s92, 1
      %s94 = scalar_select %p91, %s92, %s93
      %p97 = pneg %p91
      %p98 = scmp.eq.s32.totalorder %s11, 1
      %p99 = por %p97, %p98
      %p100 = scmp.ne.s32.totalorder %s92, %s95
      %p101 = scmp.eq.s32.totalorder %s11, 0
      %p102 = por %p100, %p101
      %p103 = scmp.ne.s32.totalorder %s92, %s95
      %p104 = scmp.eq.s32.totalorder %s16, 1
      %p105 = por %p103, %p104
      %p106 = scmp.ne.s32.totalorder %s95, %s96
      %p107 = scmp.eq.s32.totalorder %s16, 0
      %p108 = por %p106, %p107
      %p109 = scmp.ne.s32.totalorder %s95, %s96
      %p110 = scmp.eq.s32.totalorder %s17, 1
      %p111 = por %p109, %p110
      %p113 = scmp.ne.s32.totalorder %s96, %s112
      %p114 = scmp.eq.s32.totalorder %s17, 0
      %p115 = por %p113, %p114
      %s116 = ssub.s32 %s20, %s29
      %p117 = scmp.eq.s32.totalorder %s116, 0
      %s119 = sadd.s32 %s118, 1
      %s120 = scalar_select %p117, %s118, %s119
      %p123 = pneg %p117
      %p124 = scmp.eq.s32.totalorder %s11, 1
      %p125 = por %p123, %p124
      %p126 = scmp.ne.s32.totalorder %s118, %s121
      %p127 = scmp.eq.s32.totalorder %s11, 0
      %p128 = por %p126, %p127
      %p129 = scmp.ne.s32.totalorder %s118, %s121
      %p130 = scmp.eq.s32.totalorder %s16, 1
      %p131 = por %p129, %p130
      %p132 = scmp.ne.s32.totalorder %s121, %s122
      %p133 = scmp.eq.s32.totalorder %s16, 0
      %p134 = por %p132, %p133
      %p135 = scmp.ne.s32.totalorder %s121, %s122
      %p136 = scmp.eq.s32.totalorder %s17, 1
      %p137 = por %p135, %p136
      %p139 = scmp.ne.s32.totalorder %s122, %s138
      %p140 = scmp.eq.s32.totalorder %s17, 0
      %p141 = por %p139, %p140
      %s142 = ssub.s32 %s18, %s37
      %p143 = scmp.eq.s32.totalorder %s142, 0
      %s145 = sadd.s32 %s144, 1
      %s146 = scalar_select %p143, %s144, %s145
      %p149 = pneg %p143
      %p150 = scmp.eq.s32.totalorder %s11, 1
      %p151 = por %p149, %p150
      %p152 = scmp.ne.s32.totalorder %s144, %s147
      %p153 = scmp.eq.s32.totalorder %s11, 0
      %p154 = por %p152, %p153
      %p155 = scmp.ne.s32.totalorder %s144, %s147
      %p156 = scmp.eq.s32.totalorder %s16, 1
      %p157 = por %p155, %p156
      %p158 = scmp.ne.s32.totalorder %s147, %s148
      %p159 = scmp.eq.s32.totalorder %s16, 0
      %p160 = por %p158, %p159
      %p161 = scmp.ne.s32.totalorder %s147, %s148
      %p162 = scmp.eq.s32.totalorder %s17, 1
      %p163 = por %p161, %p162
      %p165 = scmp.ne.s32.totalorder %s148, %s164
      %p166 = scmp.eq.s32.totalorder %s17, 0
      %p167 = por %p165, %p166
      %p168 = scmp.le.s32.totalorder 1, %s11
      %p169 = scmp.lt.s32.totalorder %s11, 3
      %p170 = pnand %p168, %p169
      %p171 = pneg %p170
      // Predicated region
      $region9: #{tpu_custom_call.1} parent=5 // pred_check
        _
      $region10: #{tpu_custom_call.1} parent=5 // pred_check_branch
        %173 = sbr.rel (%p170) target = $region12
      $region11: #{tpu_custom_call.1} parent=5 // pred_region
        %s174 = ssub.s32 %s11, 1
        // Predicated region
        $region13: #{tpu_custom_call.1} parent=11 // pred_check
          %p175 = pneg %p82
        $region14: #{tpu_custom_call.1} parent=11 // pred_check_branch
          %177 = sbr.rel (%p175) target = $region16
        $region15: #{tpu_custom_call.1} parent=11 // pred_region
          %s178 = smul.u32 2, %s23
          %180 = vsyncadd [#allocation7], 0
          %s181 = smul.addr %s178, 8
          %s182 = scalar_lea.hbm %s1, %s181
          %s183 = sshll.u32 %s182, 4
          %s184 = int_to_ptr.hbm [resolvable:$true] %s183
          %s185 = sshll.u32 [#allocation6], 4
          %s186 = int_to_ptr.vmem [resolvable:$true] %s185
          %191 = dma.hbm_to_vmem [thread:$0]  %s184, 256, %s186, [#allocation7], 128, 128, 8
        $region16: #{tpu_custom_call.1} parent=11 // pred_fallthru
          _
        // Predicated region
        $region17: #{tpu_custom_call.1} parent=11 // pred_check
          %p192 = pneg %p134
        $region18: #{tpu_custom_call.1} parent=11 // pred_check_branch
          %194 = sbr.rel (%p192) target = $region20
        $region19: #{tpu_custom_call.1} parent=11 // pred_region
          %p195 = scmp.lt.s32.totalorder %s23, 0
          %s196 = scalar_select %p195, %s23, 0
          %s197 = scalar_lea.vmem %s3, %s196
        $region20: #{tpu_custom_call.1} parent=11 // pred_fallthru
          _
      $region12: #{tpu_custom_call.1} parent=5 // pred_fallthru
        _
      %p198 = scmp.lt.s32.totalorder %s11, 2
      // Predicated region
      $region21: #{tpu_custom_call.1} parent=5 // pred_check
        %p199 = pneg %p198
      $region22: #{tpu_custom_call.1} parent=5 // pred_check_branch
        %201 = sbr.rel (%p199) target = $region24
      $region23: #{tpu_custom_call.1} parent=5 // pred_region
        // Predicated region
        $region25: #{tpu_custom_call.1} parent=23 // pred_check
          %p202 = pneg %p50
        $region26: #{tpu_custom_call.1} parent=23 // pred_check_branch
          %204 = sbr.rel (%p202) target = $region28
        $region27: #{tpu_custom_call.1} parent=23 // pred_region
          %p205 = scmp.lt.s32.totalorder %s18, 1
          %s206 = scalar_select %p205, %s18, 1
          %s207 = smul.addr %s206, 8
          %s208 = scalar_lea.vmem %s0, %s207
        $region28: #{tpu_custom_call.1} parent=23 // pred_fallthru
          _
        // Predicated region
        $region29: #{tpu_custom_call.1} parent=23 // pred_check
          %p209 = pneg %p102
        $region30: #{tpu_custom_call.1} parent=23 // pred_check_branch
          %211 = sbr.rel (%p209) target = $region32
        $region31: #{tpu_custom_call.1} parent=23 // pred_region
          %p212 = scmp.lt.s32.totalorder %s18, 1
          %s213 = scalar_select %p212, %s18, 1
          %s214 = smul.addr %s213, 8
          %s215 = scalar_lea.vmem %s2, %s214
        $region32: #{tpu_custom_call.1} parent=23 // pred_fallthru
          _
      $region24: #{tpu_custom_call.1} parent=5 // pred_fallthru
        _
      %p216 = scmp.le.s32.totalorder 1, %s11
      %p217 = scmp.lt.s32.totalorder %s11, 3
      %p218 = pnand %p216, %p217
      %p219 = pneg %p218
      // Predicated region
      $region33: #{tpu_custom_call.1} parent=5 // pred_check
        _
      $region34: #{tpu_custom_call.1} parent=5 // pred_check_branch
        %221 = sbr.rel (%p218) target = $region36
      $region35: #{tpu_custom_call.1} parent=5 // pred_region
        %s222 = ssub.s32 %s11, 1
        // Predicated region
        $region37: #{tpu_custom_call.1} parent=35 // pred_check
          %p223 = pneg %p82
        $region38: #{tpu_custom_call.1} parent=35 // pred_check_branch
          %225 = sbr.rel (%p223) target = $region40
        $region39: #{tpu_custom_call.1} parent=35 // pred_region
          %227 = dma.done [#allocation7], 256
        $region40: #{tpu_custom_call.1} parent=35 // pred_fallthru
          _
        %p228 = scmp.lt.s32.totalorder %s21, 1
        %s229 = scalar_select %p228, %s21, 1
        %s230 = smul.addr %s229, 8
        %s231 = scalar_lea.vmem %s0, %s230
        %p232 = pneg %p56
        %p233 = pneg %p53
        %p234 = pneg %p82
        %p235 = pneg %p79
        %p236 = scmp.lt.s32.totalorder %s21, 1
        %s237 = scalar_select %p236, %s21, 1
        %s238 = smul.addr %s237, 8
        %s239 = scalar_lea.vmem %s2, %s238
        %p240 = pneg %p108
        %p241 = pneg %p105
        %p242 = scmp.lt.s32.totalorder %s23, 0
        %s243 = scalar_select %p242, %s23, 0
        %s244 = scalar_lea.vmem %s3, %s243
        %p245 = pneg %p134
        %p246 = pneg %p131
        %p247 = pneg %p160
        %p248 = pneg %p157
        %p249 = scmp.lt.s32.totalorder %s21, 1
        %s250 = scalar_select %p249, %s21, 1
        %s251 = smul.addr %s250, 8
        %s252 = scalar_lea.vmem %s4, %s251
        %p253 = scmp.lt.s32.totalorder %s21, 1
        %s254 = scalar_select %p253, %s21, 1
        %s255 = smul.addr %s254, 8
        %s256 = scalar_lea.vmem %s0, %s255
        %s257 = smul.u32 2, %s23
        %p258 = scmp.lt.s32.totalorder %s21, 1
        %s259 = scalar_select %p258, %s21, 1
        %s260 = smul.addr %s259, 8
        %s261 = scalar_lea.vmem %s2, %s260
        %p262 = scmp.lt.s32.totalorder %s23, 0
        %s263 = scalar_select %p262, %s23, 0
        %s264 = scalar_lea.vmem %s3, %s263
        %p265 = scmp.lt.s32.totalorder %s21, 1
        %s266 = scalar_select %p265, %s21, 1
        %s267 = smul.addr %s266, 8
        %s268 = scalar_lea.vmem %s4, %s267
        %s269 = smul.u32 %s21, 8
        %s270 = smul.u32 %s23, 16
        %v271 = vld [vmem:[%s256] sm:$0xff]
        %v272 = vld [vmem:[#allocation6] sm:$0xff]
        %v273 = vld [vmem:[#allocation6 + $0x8] sm:$0xff]
        %vm274 = vcmask 261120
        %v276 = vsel %vm274, %v271, 0
        %v279 = vsel %vm274, %v272, 0
        %v282 = vsel %vm274, %v273, 0
        %284 = vmatpush.xpose.msra.mxu0 0.0
        %285 = vmatpush.xpose.msra.mxu0 0.0
        %286 = vmatpush.xpose.msra.mxu0 0.0
        %287 = vmatpush.xpose.msra.mxu0 0.0
        %288 = vmatpush.xpose.msra.mxu0 0.0
        %289 = vmatpush.xpose.msra.mxu0 0.0
        %290 = vmatpush.xpose.msra.mxu0 0.0
        %291 = vmatpush.xpose.msra.mxu0 0.0
        %292 = vmatpush.xpose.msra.mxu0 0.0
        %293 = vmatpush.xpose.msra.mxu0 0.0
        %294 = vmatpush.xpose.msra.mxu0 0.0
        %295 = vmatpush.xpose.msra.mxu0 0.0
        %296 = vmatpush.xpose.msra.mxu0 0.0
        %297 = vmatpush.xpose.msra.mxu0 0.0
        %298 = vmatpush.xpose.msra.mxu0 %v282
        %299 = vmatpush.xpose.msra.mxu0 %v279
        %300 = vmatmul.f32.gmra.mxu0 %v276
        %v301 = vpop.f32.mrf.mxu0
        %v302 = vadd.f32 0.0, %v301
        %303 = vdwg.mxu0
        %v304 = vlaneseq
        %v305 = vand.u32 %v304, 127
        %v306 = vstv %s270
        %v307 = vadd.s32 %v305, %v306
        %v308 = vmul.f32 %v302, 0.25
        %vm309 = vcmask 130048
        %v310 = vsel %vm309, %v308, -inf
        %311 = vmax.xlane.f32.xlu0 %v310
        %v312 = vpop.xlane.xlu0 %311
        %v313 = vsub.f32 %v308, %v312
        %v314 = vmul.f32 %v313, 1.442695
        %v315 = vpow.pop %v314
        %v316 = vlaneseq
        %v317 = vshrl.u32 %v316, 7
        %v318 = vstv %s269
        %v319 = vadd.s32 %v317, %v318
        %vm320 = vcmp.ne.s32.totalorder %v319, %v307
        %v321 = vsel %vm320, %v315, 0.0
        %v322 = vsel %vm309, %v321, 0.0
        %323 = vadd.xlane.f32.xlu0 %v322
        %v324 = vpop.xlane.xlu0 %323
        %v325 = vld [vmem:[%s261] sm:$0xff]
        %v326 = vld [vmem:[%s264] sm:$0x1]
        %327 = vset.pattern.permute.xlu0 0
        %328 = vperm.xlu0 %327, %v325
        %v329 = vpop.permute.xlu0 %328
        %v330 = vperm.slane %v326, 0
        %vm331 = vcmp.eq.s32.totalorder %v329, %v330
        %vm332 = vmand %vm331, %vm320
        %v333 = vsel %vm332, 1.0, 0.0
        %v334 = vsel %vm309, %v333, 0.0
        %335 = vadd.xlane.f32.xlu0 %v334
        %v336 = vpop.xlane.xlu0 %335
        %v337 = vmax.f32 %v313, -23.02585
        %v338 = vmul.f32 %v333, %v337
        %v339 = vsel %vm309, %v338, 0.0
        %340 = vadd.xlane.f32.xlu0 %v339
        %v341 = vpop.xlane.xlu0 %340
        %v342 = vmax.f32 %v324, 1e-10
        %v343 = vlog2.pop %v342
        %v344 = vmul.f32 %v343, 0.6931472
        %v345 = vrcp.pop %v336
        %v346 = vmul.f32 %v336, %v345
        %v347 = vsub.f32 1.0, %v346
        %v348 = vmul.f32 %v345, %v347
        %v349 = vadd.f32 %v345, %v348
        %vm350 = vweird.f32 %v336
        %vm351 = vweird.f32 %v345
        %vm352 = vmor %vm350, %vm351
        %v353 = vsel %vm352, %v345, %v349
        %v354 = vand.u32 2147483647, %v336
        %vm355 = vcmp.eq.f32.partialorder %v354, 8.507059e+37
        %v356 = vand.u32 %v336, 2147483648
        %v357 = vor.u32 1.1754944e-38, %v356
        %v358 = vsel %vm355, %v357, %v353
        %v359 = vmul.f32 %v341, %v358
        %v360 = vsub.f32 %v344, %v359
        %vm361 = vcmask 7168
        %362 = vst.msk [vmem:[%s268] sm:$0xff] %vm361, %v360
        %p363 = scmp.lt.s32.totalorder %s21, 1
        %s364 = scalar_select %p363, %s21, 1
        %s365 = smul.addr %s364, 8
        %s366 = scalar_lea.vmem %s4, %s365
        // Predicated region
        $region41: #{tpu_custom_call.1} parent=35 // pred_check
          %p367 = pneg %p157
        $region42: #{tpu_custom_call.1} parent=35 // pred_check_branch
          %369 = sbr.rel (%p367) target = $region44
        $region43: #{tpu_custom_call.1} parent=35 // pred_region
          _
        $region44: #{tpu_custom_call.1} parent=35 // pred_fallthru
          _
      $region36: #{tpu_custom_call.1} parent=5 // pred_fallthru
        _
      %p370 = scmp.le.s32.totalorder 2, %s11
      // Predicated region
      $region45: #{tpu_custom_call.1} parent=5 // pred_check
        %p371 = pneg %p370
      $region46: #{tpu_custom_call.1} parent=5 // pred_check_branch
        %373 = sbr.rel (%p371) target = $region48
      $region47: #{tpu_custom_call.1} parent=5 // pred_region
        %s374 = ssub.s32 %s11, 2
        // Predicated region
        $region49: #{tpu_custom_call.1} parent=47 // pred_check
          %p375 = pneg %p163
        $region50: #{tpu_custom_call.1} parent=47 // pred_check_branch
          %377 = sbr.rel (%p375) target = $region52
        $region51: #{tpu_custom_call.1} parent=47 // pred_region
          %p378 = scmp.lt.s32.totalorder %s24, 1
          %s379 = scalar_select %p378, %s24, 1
          %s380 = smul.addr %s379, 8
          %s381 = scalar_lea.vmem %s4, %s380
        $region52: #{tpu_custom_call.1} parent=47 // pred_fallthru
          _
      $region48: #{tpu_custom_call.1} parent=5 // pred_fallthru
        _
    $region6: #{tpu_custom_call.1} parent=1 // loop_footer
      %s15 = sadd.s32 1, %s11
    $region7: #{tpu_custom_call.1} parent=1 // loop_footer_branch
      %10 = sbr.rel target = $region3
    $region8: #{tpu_custom_call.1} parent=1 // loop_exit
      _
    %382 = vsyncpa [#allocation7], 1
    %s383 = scalar_lea.sflag [#allocation7], 1
    %384 = vsyncpa %s383, 1

</llo_original>
